<compile_context>
chip_gen: v7x
topology: tpu7x:2x2x1
jax: 0.10.0
libtpu: 0.0.40
codegen_flags: <defaults>
</compile_context>

<pallas_src>
import jax
import jax.numpy as jnp
from jax.experimental import pallas as pl
from jax.experimental.pallas import tpu as pltpu


def _fusionshort_kernel(w1_ref, b1_ref, w2_ref, b2_ref,
                        x_ref, xd_ref, xs_ref, o_ref):
    # w*_ref: (C*C,) f32 in SMEM; b*_ref: (C,) f32 in SMEM.
    # x/xd/xs/o refs: (C, row_tile, L) VMEM blocks; each [c] slab is dense.
    C = o_ref.shape[0]

    xd = [xd_ref[c] for c in range(C)]

    # conv1 (1x1) + ReLU: h[o] = relu(sum_i w1[o,i] * xd[i] + b1[o])
    # Unrolled scalar-weight FMAs on the VPU (C=4 -> 16 FMAs per conv).
    h = []
    for o in range(C):
        acc = w1_ref[o * C] * xd[0]
        for i in range(1, C):
            acc = acc + w1_ref[o * C + i] * xd[i]
        h.append(jnp.maximum(acc + b1_ref[o], 0.0))

    # conv2 (1x1) + sigmoid gate, then blend: out = xs + rate * (x - xs)
    for o in range(C):
        z = w2_ref[o * C] * h[0]
        for i in range(1, C):
            z = z + w2_ref[o * C + i] * h[i]
        rate = jax.nn.sigmoid(z + b2_ref[o])
        x_c = x_ref[o]
        xs_c = xs_ref[o]
        o_ref[o] = (xs_c + rate * (x_c - xs_c)).astype(o_ref.dtype)


def fusionshort_pallas(x, x_diff, x_short, w1, b1, w2, b2):
    """x, x_diff, x_short: NCHW arrays. w1/w2: (C, C, 1, 1), b1/b2: (C,)."""
    N, C, H, W = x.shape
    HW = H * W
    itemsize = jnp.dtype(x.dtype).itemsize

    # ---- pixel layout: (N, C, R, L) with L a multiple of 128 -------------
    L = None
    for cand in (1024, 512, 256, 128):
        if HW % cand == 0:
            L = cand
            break
    if L is None:
        # Uncommon spatial sizes: pad the flattened pixel axis to 128 lanes.
        L = 128
        HW_pad = -(-HW // L) * L
    else:
        HW_pad = HW
    R = HW_pad // L

    def to_rows(a):
        a = a.reshape(N, C, HW)
        if HW_pad != HW:
            a = jnp.pad(a, ((0, 0), (0, 0), (0, HW_pad - HW)))
        return a.reshape(N, C, R, L)

    xm, xdm, xsm = to_rows(x), to_rows(x_diff), to_rows(x_short)

    # PyTorch conv1x1: y[o] = sum_i W[o, i] * x[i] + b[o]
    w1f = w1.reshape(C * C).astype(jnp.float32)
    w2f = w2.reshape(C * C).astype(jnp.float32)
    b1f = b1.reshape(C).astype(jnp.float32)
    b2f = b2.reshape(C).astype(jnp.float32)

    # ---- generation-aware tile sizing ------------------------------------
    try:
        vmem_cap = int(pltpu.get_tpu_info().vmem_capacity_bytes)
    except Exception:
        vmem_cap = 64 * 1024 * 1024  # conservative (v7x per-core VMEM)
    vmem_budget = int(vmem_cap * 0.6)

    # 3 inputs + 1 output, double-buffered by the pipeline.
    bytes_per_px = 4 * 2 * C * itemsize
    max_px = max(8 * L, (vmem_budget - (4 << 20)) // bytes_per_px)
    row_tile = min(R, max(8, (max_px // L) // 8 * 8))

    # Keep at least 2 grid blocks so both v7x TensorCores get work.
    if N == 1 and R > 8:
        half = max(8, ((-(-R // 2)) // 8) * 8)
        row_tile = min(row_tile, half)

    grid = (N, pl.cdiv(R, row_tile))

    # ---- VMEM limit from the real padded, double-buffered footprint ------
    row_tile_pad = -(-row_tile // 8) * 8
    block_bytes = C * row_tile_pad * L * itemsize
    vmem_limit = max(16 << 20, 8 * block_bytes + (2 << 20))
    vmem_limit = int(min(vmem_limit, vmem_cap - (8 << 20)))

    px_spec = pl.BlockSpec((None, C, row_tile, L), lambda n, r: (n, 0, r, 0))
    smem_spec = pl.BlockSpec(memory_space=pltpu.MemorySpace.SMEM)

    out_rows = pl.pallas_call(
        _fusionshort_kernel,
        out_shape=jax.ShapeDtypeStruct((N, C, R, L), x.dtype),
        grid_spec=pltpu.PrefetchScalarGridSpec(
            num_scalar_prefetch=0,
            grid=grid,
            in_specs=[smem_spec, smem_spec, smem_spec, smem_spec,
                      px_spec, px_spec, px_spec],
            out_specs=px_spec,
        ),
        compiler_params=pltpu.CompilerParams(
            dimension_semantics=("parallel", "parallel"),
            vmem_limit_bytes=vmem_limit,
        ),
    )(w1f, b1f, w2f, b2f, xm, xdm, xsm)

    out = out_rows.reshape(N, C, HW_pad)
    if HW_pad != HW:
        out = out[:, :, :HW]
    return out.reshape(N, C, H, W)


def _reference(x, x_diff, x_short, w1, b1, w2, b2):
    """Plain-JAX reference matching the PyTorch forward (NCHW)."""
    N, C, H, W = x.shape
    xd = jnp.transpose(x_diff, (0, 2, 3, 1)).reshape(-1, C)
    h = jnp.maximum(xd @ w1.reshape(C, C).T + b1, 0.0)
    rate = jax.nn.sigmoid(h @ w2.reshape(C, C).T + b2)
    rate = jnp.transpose(rate.reshape(N, H, W, C), (0, 3, 1, 2))
    return rate * x + (1.0 - rate) * x_short


if __name__ == "__main__":
    key = jax.random.PRNGKey(0)
    kx, kd, ks, kw1, kb1, kw2, kb2 = jax.random.split(key, 7)

    N, C, H, W = 2, 4, 16, 16  # small shapes consistent with the module
    x = jax.random.normal(kx, (N, C, H, W), dtype=jnp.float32)
    x_diff = jax.random.normal(kd, (N, C, H, W), dtype=jnp.float32)
    x_short = jax.random.normal(ks, (N, C, H, W), dtype=jnp.float32)

    # Deterministic synthetic Conv2d(channel, channel, (1,1)) parameters.
    w1 = 0.3 * jax.random.normal(kw1, (C, C, 1, 1), dtype=jnp.float32)
    b1 = 0.1 * jax.random.normal(kb1, (C,), dtype=jnp.float32)
    w2 = 0.3 * jax.random.normal(kw2, (C, C, 1, 1), dtype=jnp.float32)
    b2 = 0.1 * jax.random.normal(kb2, (C,), dtype=jnp.float32)

    out = fusionshort_pallas(x, x_diff, x_short, w1, b1, w2, b2)
    out = jax.block_until_ready(out)

    ref = _reference(x, x_diff, x_short, w1, b1, w2, b2)
    assert out.shape == (N, C, H, W)
    assert jnp.max(jnp.abs(out - ref)) < 1e-5

    print("KERNEL_OK")
</pallas_src>

<mosaic_0001>
module attributes {stable_mosaic.version = 11 : i64} {
  func.func @_fusionshort_kernel(%arg0: i32, %arg1: i32, %arg2: memref<16xf32, #tpu.memory_space<smem>>, %arg3: memref<4xf32, #tpu.memory_space<smem>>, %arg4: memref<16xf32, #tpu.memory_space<smem>>, %arg5: memref<4xf32, #tpu.memory_space<smem>>, %arg6: memref<1x4x1x256xf32, #tpu.memory_space<vmem>>, %arg7: memref<1x4x1x256xf32, #tpu.memory_space<vmem>>, %arg8: memref<1x4x1x256xf32, #tpu.memory_space<vmem>>, %arg9: memref<1x4x1x256xf32, #tpu.memory_space<vmem>>) attributes {dimension_semantics = [#tpu.dimension_semantics<parallel>, #tpu.dimension_semantics<parallel>], iteration_bounds = array<i64: 2, 1>, scalar_prefetch = 0 : i64, scratch_operands = 0 : i64, tpu.core_type = #tpu.core_type<tc>, window_params = [{transform_indices = @transform_0, window_bounds = array<i64: 16>}, {transform_indices = @transform_1, window_bounds = array<i64: 4>}, {transform_indices = @transform_2, window_bounds = array<i64: 16>}, {transform_indices = @transform_3, window_bounds = array<i64: 4>}, {transform_indices = @transform_4, window_bounds = array<i64: 1, 4, 1, 256>}, {transform_indices = @transform_5, window_bounds = array<i64: 1, 4, 1, 256>}, {transform_indices = @transform_6, window_bounds = array<i64: 1, 4, 1, 256>}, {transform_indices = @transform_7, window_bounds = array<i64: 1, 4, 1, 256>}]} {
    %c0 = arith.constant 0 : index
    %c0_0 = arith.constant 0 : index
    %c0_1 = arith.constant 0 : index
    %c0_2 = arith.constant 0 : index
    %0 = vector.load %arg7[%c0, %c0_0, %c0_1, %c0_2] : memref<1x4x1x256xf32, #tpu.memory_space<vmem>>, vector<1x1x1x256xf32>
    %1 = vector.shape_cast %0 : vector<1x1x1x256xf32> to vector<1x256xf32>
    %c0_3 = arith.constant 0 : index
    %c1 = arith.constant 1 : index
    %c0_4 = arith.constant 0 : index
    %c0_5 = arith.constant 0 : index
    %2 = vector.load %arg7[%c0_3, %c1, %c0_4, %c0_5] : memref<1x4x1x256xf32, #tpu.memory_space<vmem>>, vector<1x1x1x256xf32>
    %3 = vector.shape_cast %2 : vector<1x1x1x256xf32> to vector<1x256xf32>
    %c0_6 = arith.constant 0 : index
    %c2 = arith.constant 2 : index
    %c0_7 = arith.constant 0 : index
    %c0_8 = arith.constant 0 : index
    %4 = vector.load %arg7[%c0_6, %c2, %c0_7, %c0_8] : memref<1x4x1x256xf32, #tpu.memory_space<vmem>>, vector<1x1x1x256xf32>
    %5 = vector.shape_cast %4 : vector<1x1x1x256xf32> to vector<1x256xf32>
    %c0_9 = arith.constant 0 : index
    %c3 = arith.constant 3 : index
    %c0_10 = arith.constant 0 : index
    %c0_11 = arith.constant 0 : index
    %6 = vector.load %arg7[%c0_9, %c3, %c0_10, %c0_11] : memref<1x4x1x256xf32, #tpu.memory_space<vmem>>, vector<1x1x1x256xf32>
    %7 = vector.shape_cast %6 : vector<1x1x1x256xf32> to vector<1x256xf32>
    %c0_12 = arith.constant 0 : index
    %8 = memref.load %arg2[%c0_12] : memref<16xf32, #tpu.memory_space<smem>>
    %9 = vector.broadcast %8 : f32 to vector<1x256xf32>
    %10 = arith.mulf %9, %1 : vector<1x256xf32>
    %c1_13 = arith.constant 1 : index
    %11 = memref.load %arg2[%c1_13] : memref<16xf32, #tpu.memory_space<smem>>
    %12 = vector.broadcast %11 : f32 to vector<1x256xf32>
    %13 = arith.mulf %12, %3 : vector<1x256xf32>
    %14 = arith.addf %10, %13 : vector<1x256xf32>
    %c2_14 = arith.constant 2 : index
    %15 = memref.load %arg2[%c2_14] : memref<16xf32, #tpu.memory_space<smem>>
    %16 = vector.broadcast %15 : f32 to vector<1x256xf32>
    %17 = arith.mulf %16, %5 : vector<1x256xf32>
    %18 = arith.addf %14, %17 : vector<1x256xf32>
    %c3_15 = arith.constant 3 : index
    %19 = memref.load %arg2[%c3_15] : memref<16xf32, #tpu.memory_space<smem>>
    %20 = vector.broadcast %19 : f32 to vector<1x256xf32>
    %21 = arith.mulf %20, %7 : vector<1x256xf32>
    %22 = arith.addf %18, %21 : vector<1x256xf32>
    %c0_16 = arith.constant 0 : index
    %23 = memref.load %arg3[%c0_16] : memref<4xf32, #tpu.memory_space<smem>>
    %24 = vector.broadcast %23 : f32 to vector<1x256xf32>
    %25 = arith.addf %22, %24 : vector<1x256xf32>
    %cst = arith.constant 0.000000e+00 : f32
    %26 = vector.broadcast %cst : f32 to vector<1x256xf32>
    %27 = arith.maximumf %25, %26 : vector<1x256xf32>
    %c4 = arith.constant 4 : index
    %28 = memref.load %arg2[%c4] : memref<16xf32, #tpu.memory_space<smem>>
    %29 = vector.broadcast %28 : f32 to vector<1x256xf32>
    %30 = arith.mulf %29, %1 : vector<1x256xf32>
    %c5 = arith.constant 5 : index
    %31 = memref.load %arg2[%c5] : memref<16xf32, #tpu.memory_space<smem>>
    %32 = vector.broadcast %31 : f32 to vector<1x256xf32>
    %33 = arith.mulf %32, %3 : vector<1x256xf32>
    %34 = arith.addf %30, %33 : vector<1x256xf32>
    %c6 = arith.constant 6 : index
    %35 = memref.load %arg2[%c6] : memref<16xf32, #tpu.memory_space<smem>>
    %36 = vector.broadcast %35 : f32 to vector<1x256xf32>
    %37 = arith.mulf %36, %5 : vector<1x256xf32>
    %38 = arith.addf %34, %37 : vector<1x256xf32>
    %c7 = arith.constant 7 : index
    %39 = memref.load %arg2[%c7] : memref<16xf32, #tpu.memory_space<smem>>
    %40 = vector.broadcast %39 : f32 to vector<1x256xf32>
    %41 = arith.mulf %40, %7 : vector<1x256xf32>
    %42 = arith.addf %38, %41 : vector<1x256xf32>
    %c1_17 = arith.constant 1 : index
    %43 = memref.load %arg3[%c1_17] : memref<4xf32, #tpu.memory_space<smem>>
    %44 = vector.broadcast %43 : f32 to vector<1x256xf32>
    %45 = arith.addf %42, %44 : vector<1x256xf32>
    %cst_18 = arith.constant 0.000000e+00 : f32
    %46 = vector.broadcast %cst_18 : f32 to vector<1x256xf32>
    %47 = arith.maximumf %45, %46 : vector<1x256xf32>
    %c8 = arith.constant 8 : index
    %48 = memref.load %arg2[%c8] : memref<16xf32, #tpu.memory_space<smem>>
    %49 = vector.broadcast %48 : f32 to vector<1x256xf32>
    %50 = arith.mulf %49, %1 : vector<1x256xf32>
    %c9 = arith.constant 9 : index
    %51 = memref.load %arg2[%c9] : memref<16xf32, #tpu.memory_space<smem>>
    %52 = vector.broadcast %51 : f32 to vector<1x256xf32>
    %53 = arith.mulf %52, %3 : vector<1x256xf32>
    %54 = arith.addf %50, %53 : vector<1x256xf32>
    %c10 = arith.constant 10 : index
    %55 = memref.load %arg2[%c10] : memref<16xf32, #tpu.memory_space<smem>>
    %56 = vector.broadcast %55 : f32 to vector<1x256xf32>
    %57 = arith.mulf %56, %5 : vector<1x256xf32>
    %58 = arith.addf %54, %57 : vector<1x256xf32>
    %c11 = arith.constant 11 : index
    %59 = memref.load %arg2[%c11] : memref<16xf32, #tpu.memory_space<smem>>
    %60 = vector.broadcast %59 : f32 to vector<1x256xf32>
    %61 = arith.mulf %60, %7 : vector<1x256xf32>
    %62 = arith.addf %58, %61 : vector<1x256xf32>
    %c2_19 = arith.constant 2 : index
    %63 = memref.load %arg3[%c2_19] : memref<4xf32, #tpu.memory_space<smem>>
    %64 = vector.broadcast %63 : f32 to vector<1x256xf32>
    %65 = arith.addf %62, %64 : vector<1x256xf32>
    %cst_20 = arith.constant 0.000000e+00 : f32
    %66 = vector.broadcast %cst_20 : f32 to vector<1x256xf32>
    %67 = arith.maximumf %65, %66 : vector<1x256xf32>
    %c12 = arith.constant 12 : index
    %68 = memref.load %arg2[%c12] : memref<16xf32, #tpu.memory_space<smem>>
    %69 = vector.broadcast %68 : f32 to vector<1x256xf32>
    %70 = arith.mulf %69, %1 : vector<1x256xf32>
    %c13 = arith.constant 13 : index
    %71 = memref.load %arg2[%c13] : memref<16xf32, #tpu.memory_space<smem>>
    %72 = vector.broadcast %71 : f32 to vector<1x256xf32>
    %73 = arith.mulf %72, %3 : vector<1x256xf32>
    %74 = arith.addf %70, %73 : vector<1x256xf32>
    %c14 = arith.constant 14 : index
    %75 = memref.load %arg2[%c14] : memref<16xf32, #tpu.memory_space<smem>>
    %76 = vector.broadcast %75 : f32 to vector<1x256xf32>
    %77 = arith.mulf %76, %5 : vector<1x256xf32>
    %78 = arith.addf %74, %77 : vector<1x256xf32>
    %c15 = arith.constant 15 : index
    %79 = memref.load %arg2[%c15] : memref<16xf32, #tpu.memory_space<smem>>
    %80 = vector.broadcast %79 : f32 to vector<1x256xf32>
    %81 = arith.mulf %80, %7 : vector<1x256xf32>
    %82 = arith.addf %78, %81 : vector<1x256xf32>
    %c3_21 = arith.constant 3 : index
    %83 = memref.load %arg3[%c3_21] : memref<4xf32, #tpu.memory_space<smem>>
    %84 = vector.broadcast %83 : f32 to vector<1x256xf32>
    %85 = arith.addf %82, %84 : vector<1x256xf32>
    %cst_22 = arith.constant 0.000000e+00 : f32
    %86 = vector.broadcast %cst_22 : f32 to vector<1x256xf32>
    %87 = arith.maximumf %85, %86 : vector<1x256xf32>
    %c0_23 = arith.constant 0 : index
    %88 = memref.load %arg4[%c0_23] : memref<16xf32, #tpu.memory_space<smem>>
    %89 = vector.broadcast %88 : f32 to vector<1x256xf32>
    %90 = arith.mulf %89, %27 : vector<1x256xf32>
    %c1_24 = arith.constant 1 : index
    %91 = memref.load %arg4[%c1_24] : memref<16xf32, #tpu.memory_space<smem>>
    %92 = vector.broadcast %91 : f32 to vector<1x256xf32>
    %93 = arith.mulf %92, %47 : vector<1x256xf32>
    %94 = arith.addf %90, %93 : vector<1x256xf32>
    %c2_25 = arith.constant 2 : index
    %95 = memref.load %arg4[%c2_25] : memref<16xf32, #tpu.memory_space<smem>>
    %96 = vector.broadcast %95 : f32 to vector<1x256xf32>
    %97 = arith.mulf %96, %67 : vector<1x256xf32>
    %98 = arith.addf %94, %97 : vector<1x256xf32>
    %c3_26 = arith.constant 3 : index
    %99 = memref.load %arg4[%c3_26] : memref<16xf32, #tpu.memory_space<smem>>
    %100 = vector.broadcast %99 : f32 to vector<1x256xf32>
    %101 = arith.mulf %100, %87 : vector<1x256xf32>
    %102 = arith.addf %98, %101 : vector<1x256xf32>
    %c0_27 = arith.constant 0 : index
    %103 = memref.load %arg5[%c0_27] : memref<4xf32, #tpu.memory_space<smem>>
    %104 = vector.broadcast %103 : f32 to vector<1x256xf32>
    %105 = arith.addf %102, %104 : vector<1x256xf32>
    %106 = arith.negf %105 : vector<1x256xf32>
    %107 = math.exp %106 : vector<1x256xf32>
    %cst_28 = arith.constant 1.000000e+00 : f32
    %108 = vector.broadcast %cst_28 : f32 to vector<1x256xf32>
    %109 = arith.addf %108, %107 : vector<1x256xf32>
    %110 = arith.divf %108, %109 : vector<1x256xf32>
    %c0_29 = arith.constant 0 : index
    %c0_30 = arith.constant 0 : index
    %c0_31 = arith.constant 0 : index
    %c0_32 = arith.constant 0 : index
    %111 = vector.load %arg6[%c0_29, %c0_30, %c0_31, %c0_32] : memref<1x4x1x256xf32, #tpu.memory_space<vmem>>, vector<1x1x1x256xf32>
    %112 = vector.shape_cast %111 : vector<1x1x1x256xf32> to vector<1x256xf32>
    %c0_33 = arith.constant 0 : index
    %c0_34 = arith.constant 0 : index
    %c0_35 = arith.constant 0 : index
    %c0_36 = arith.constant 0 : index
    %113 = vector.load %arg8[%c0_33, %c0_34, %c0_35, %c0_36] : memref<1x4x1x256xf32, #tpu.memory_space<vmem>>, vector<1x1x1x256xf32>
    %114 = vector.shape_cast %113 : vector<1x1x1x256xf32> to vector<1x256xf32>
    %115 = arith.subf %112, %114 : vector<1x256xf32>
    %116 = arith.mulf %110, %115 : vector<1x256xf32>
    %117 = arith.addf %114, %116 : vector<1x256xf32>
    %c0_37 = arith.constant 0 : index
    %c0_38 = arith.constant 0 : index
    %c0_39 = arith.constant 0 : index
    %c0_40 = arith.constant 0 : index
    %118 = vector.load %arg9[%c0_37, %c0_38, %c0_39, %c0_40] : memref<1x4x1x256xf32, #tpu.memory_space<vmem>>, vector<1x1x1x256xf32>
    %119 = vector.shape_cast %118 : vector<1x1x1x256xf32> to vector<1x256xf32>
    %120 = vector.shape_cast %117 : vector<1x256xf32> to vector<1x1x1x256xf32>
    tpu.vector_store %arg9[%c0_37, %c0_38, %c0_39, %c0_40], %120 {strides = array<i32>} : memref<1x4x1x256xf32, #tpu.memory_space<vmem>>, vector<1x1x1x256xf32>,
    %c4_41 = arith.constant 4 : index
    %121 = memref.load %arg4[%c4_41] : memref<16xf32, #tpu.memory_space<smem>>
    %122 = vector.broadcast %121 : f32 to vector<1x256xf32>
    %123 = arith.mulf %122, %27 : vector<1x256xf32>
    %c5_42 = arith.constant 5 : index
    %124 = memref.load %arg4[%c5_42] : memref<16xf32, #tpu.memory_space<smem>>
    %125 = vector.broadcast %124 : f32 to vector<1x256xf32>
    %126 = arith.mulf %125, %47 : vector<1x256xf32>
    %127 = arith.addf %123, %126 : vector<1x256xf32>
    %c6_43 = arith.constant 6 : index
    %128 = memref.load %arg4[%c6_43] : memref<16xf32, #tpu.memory_space<smem>>
    %129 = vector.broadcast %128 : f32 to vector<1x256xf32>
    %130 = arith.mulf %129, %67 : vector<1x256xf32>
    %131 = arith.addf %127, %130 : vector<1x256xf32>
    %c7_44 = arith.constant 7 : index
    %132 = memref.load %arg4[%c7_44] : memref<16xf32, #tpu.memory_space<smem>>
    %133 = vector.broadcast %132 : f32 to vector<1x256xf32>
    %134 = arith.mulf %133, %87 : vector<1x256xf32>
    %135 = arith.addf %131, %134 : vector<1x256xf32>
    %c1_45 = arith.constant 1 : index
    %136 = memref.load %arg5[%c1_45] : memref<4xf32, #tpu.memory_space<smem>>
    %137 = vector.broadcast %136 : f32 to vector<1x256xf32>
    %138 = arith.addf %135, %137 : vector<1x256xf32>
    %139 = arith.negf %138 : vector<1x256xf32>
    %140 = math.exp %139 : vector<1x256xf32>
    %cst_46 = arith.constant 1.000000e+00 : f32
    %141 = vector.broadcast %cst_46 : f32 to vector<1x256xf32>
    %142 = arith.addf %141, %140 : vector<1x256xf32>
    %143 = arith.divf %141, %142 : vector<1x256xf32>
    %c0_47 = arith.constant 0 : index
    %c1_48 = arith.constant 1 : index
    %c0_49 = arith.constant 0 : index
    %c0_50 = arith.constant 0 : index
    %144 = vector.load %arg6[%c0_47, %c1_48, %c0_49, %c0_50] : memref<1x4x1x256xf32, #tpu.memory_space<vmem>>, vector<1x1x1x256xf32>
    %145 = vector.shape_cast %144 : vector<1x1x1x256xf32> to vector<1x256xf32>
    %c0_51 = arith.constant 0 : index
    %c1_52 = arith.constant 1 : index
    %c0_53 = arith.constant 0 : index
    %c0_54 = arith.constant 0 : index
    %146 = vector.load %arg8[%c0_51, %c1_52, %c0_53, %c0_54] : memref<1x4x1x256xf32, #tpu.memory_space<vmem>>, vector<1x1x1x256xf32>
    %147 = vector.shape_cast %146 : vector<1x1x1x256xf32> to vector<1x256xf32>
    %148 = arith.subf %145, %147 : vector<1x256xf32>
    %149 = arith.mulf %143, %148 : vector<1x256xf32>
    %150 = arith.addf %147, %149 : vector<1x256xf32>
    %c0_55 = arith.constant 0 : index
    %c1_56 = arith.constant 1 : index
    %c0_57 = arith.constant 0 : index
    %c0_58 = arith.constant 0 : index
    %151 = vector.load %arg9[%c0_55, %c1_56, %c0_57, %c0_58] : memref<1x4x1x256xf32, #tpu.memory_space<vmem>>, vector<1x1x1x256xf32>
    %152 = vector.shape_cast %151 : vector<1x1x1x256xf32> to vector<1x256xf32>
    %153 = vector.shape_cast %150 : vector<1x256xf32> to vector<1x1x1x256xf32>
    tpu.vector_store %arg9[%c0_55, %c1_56, %c0_57, %c0_58], %153 {strides = array<i32>} : memref<1x4x1x256xf32, #tpu.memory_space<vmem>>, vector<1x1x1x256xf32>,
    %c8_59 = arith.constant 8 : index
    %154 = memref.load %arg4[%c8_59] : memref<16xf32, #tpu.memory_space<smem>>
    %155 = vector.broadcast %154 : f32 to vector<1x256xf32>
    %156 = arith.mulf %155, %27 : vector<1x256xf32>
    %c9_60 = arith.constant 9 : index
    %157 = memref.load %arg4[%c9_60] : memref<16xf32, #tpu.memory_space<smem>>
    %158 = vector.broadcast %157 : f32 to vector<1x256xf32>
    %159 = arith.mulf %158, %47 : vector<1x256xf32>
    %160 = arith.addf %156, %159 : vector<1x256xf32>
    %c10_61 = arith.constant 10 : index
    %161 = memref.load %arg4[%c10_61] : memref<16xf32, #tpu.memory_space<smem>>
    %162 = vector.broadcast %161 : f32 to vector<1x256xf32>
    %163 = arith.mulf %162, %67 : vector<1x256xf32>
    %164 = arith.addf %160, %163 : vector<1x256xf32>
    %c11_62 = arith.constant 11 : index
    %165 = memref.load %arg4[%c11_62] : memref<16xf32, #tpu.memory_space<smem>>
    %166 = vector.broadcast %165 : f32 to vector<1x256xf32>
    %167 = arith.mulf %166, %87 : vector<1x256xf32>
    %168 = arith.addf %164, %167 : vector<1x256xf32>
    %c2_63 = arith.constant 2 : index
    %169 = memref.load %arg5[%c2_63] : memref<4xf32, #tpu.memory_space<smem>>
    %170 = vector.broadcast %169 : f32 to vector<1x256xf32>
    %171 = arith.addf %168, %170 : vector<1x256xf32>
    %172 = arith.negf %171 : vector<1x256xf32>
    %173 = math.exp %172 : vector<1x256xf32>
    %cst_64 = arith.constant 1.000000e+00 : f32
    %174 = vector.broadcast %cst_64 : f32 to vector<1x256xf32>
    %175 = arith.addf %174, %173 : vector<1x256xf32>
    %176 = arith.divf %174, %175 : vector<1x256xf32>
    %c0_65 = arith.constant 0 : index
    %c2_66 = arith.constant 2 : index
    %c0_67 = arith.constant 0 : index
    %c0_68 = arith.constant 0 : index
    %177 = vector.load %arg6[%c0_65, %c2_66, %c0_67, %c0_68] : memref<1x4x1x256xf32, #tpu.memory_space<vmem>>, vector<1x1x1x256xf32>
    %178 = vector.shape_cast %177 : vector<1x1x1x256xf32> to vector<1x256xf32>
    %c0_69 = arith.constant 0 : index
    %c2_70 = arith.constant 2 : index
    %c0_71 = arith.constant 0 : index
    %c0_72 = arith.constant 0 : index
    %179 = vector.load %arg8[%c0_69, %c2_70, %c0_71, %c0_72] : memref<1x4x1x256xf32, #tpu.memory_space<vmem>>, vector<1x1x1x256xf32>
    %180 = vector.shape_cast %179 : vector<1x1x1x256xf32> to vector<1x256xf32>
    %181 = arith.subf %178, %180 : vector<1x256xf32>
    %182 = arith.mulf %176, %181 : vector<1x256xf32>
    %183 = arith.addf %180, %182 : vector<1x256xf32>
    %c0_73 = arith.constant 0 : index
    %c2_74 = arith.constant 2 : index
    %c0_75 = arith.constant 0 : index
    %c0_76 = arith.constant 0 : index
    %184 = vector.load %arg9[%c0_73, %c2_74, %c0_75, %c0_76] : memref<1x4x1x256xf32, #tpu.memory_space<vmem>>, vector<1x1x1x256xf32>
    %185 = vector.shape_cast %184 : vector<1x1x1x256xf32> to vector<1x256xf32>
    %186 = vector.shape_cast %183 : vector<1x256xf32> to vector<1x1x1x256xf32>
    tpu.vector_store %arg9[%c0_73, %c2_74, %c0_75, %c0_76], %186 {strides = array<i32>} : memref<1x4x1x256xf32, #tpu.memory_space<vmem>>, vector<1x1x1x256xf32>,
    %c12_77 = arith.constant 12 : index
    %187 = memref.load %arg4[%c12_77] : memref<16xf32, #tpu.memory_space<smem>>
    %188 = vector.broadcast %187 : f32 to vector<1x256xf32>
    %189 = arith.mulf %188, %27 : vector<1x256xf32>
    %c13_78 = arith.constant 13 : index
    %190 = memref.load %arg4[%c13_78] : memref<16xf32, #tpu.memory_space<smem>>
    %191 = vector.broadcast %190 : f32 to vector<1x256xf32>
    %192 = arith.mulf %191, %47 : vector<1x256xf32>
    %193 = arith.addf %189, %192 : vector<1x256xf32>
    %c14_79 = arith.constant 14 : index
    %194 = memref.load %arg4[%c14_79] : memref<16xf32, #tpu.memory_space<smem>>
    %195 = vector.broadcast %194 : f32 to vector<1x256xf32>
    %196 = arith.mulf %195, %67 : vector<1x256xf32>
    %197 = arith.addf %193, %196 : vector<1x256xf32>
    %c15_80 = arith.constant 15 : index
    %198 = memref.load %arg4[%c15_80] : memref<16xf32, #tpu.memory_space<smem>>
    %199 = vector.broadcast %198 : f32 to vector<1x256xf32>
    %200 = arith.mulf %199, %87 : vector<1x256xf32>
    %201 = arith.addf %197, %200 : vector<1x256xf32>
    %c3_81 = arith.constant 3 : index
    %202 = memref.load %arg5[%c3_81] : memref<4xf32, #tpu.memory_space<smem>>
    %203 = vector.broadcast %202 : f32 to vector<1x256xf32>
    %204 = arith.addf %201, %203 : vector<1x256xf32>
    %205 = arith.negf %204 : vector<1x256xf32>
    %206 = math.exp %205 : vector<1x256xf32>
    %cst_82 = arith.constant 1.000000e+00 : f32
    %207 = vector.broadcast %cst_82 : f32 to vector<1x256xf32>
    %208 = arith.addf %207, %206 : vector<1x256xf32>
    %209 = arith.divf %207, %208 : vector<1x256xf32>
    %c0_83 = arith.constant 0 : index
    %c3_84 = arith.constant 3 : index
    %c0_85 = arith.constant 0 : index
    %c0_86 = arith.constant 0 : index
    %210 = vector.load %arg6[%c0_83, %c3_84, %c0_85, %c0_86] : memref<1x4x1x256xf32, #tpu.memory_space<vmem>>, vector<1x1x1x256xf32>
    %211 = vector.shape_cast %210 : vector<1x1x1x256xf32> to vector<1x256xf32>
    %c0_87 = arith.constant 0 : index
    %c3_88 = arith.constant 3 : index
    %c0_89 = arith.constant 0 : index
    %c0_90 = arith.constant 0 : index
    %212 = vector.load %arg8[%c0_87, %c3_88, %c0_89, %c0_90] : memref<1x4x1x256xf32, #tpu.memory_space<vmem>>, vector<1x1x1x256xf32>
    %213 = vector.shape_cast %212 : vector<1x1x1x256xf32> to vector<1x256xf32>
    %214 = arith.subf %211, %213 : vector<1x256xf32>
    %215 = arith.mulf %209, %214 : vector<1x256xf32>
    %216 = arith.addf %213, %215 : vector<1x256xf32>
    %c0_91 = arith.constant 0 : index
    %c3_92 = arith.constant 3 : index
    %c0_93 = arith.constant 0 : index
    %c0_94 = arith.constant 0 : index
    %217 = vector.load %arg9[%c0_91, %c3_92, %c0_93, %c0_94] : memref<1x4x1x256xf32, #tpu.memory_space<vmem>>, vector<1x1x1x256xf32>
    %218 = vector.shape_cast %217 : vector<1x1x1x256xf32> to vector<1x256xf32>
    %219 = vector.shape_cast %216 : vector<1x256xf32> to vector<1x1x1x256xf32>
    tpu.vector_store %arg9[%c0_91, %c3_92, %c0_93, %c0_94], %219 {strides = array<i32>} : memref<1x4x1x256xf32, #tpu.memory_space<vmem>>, vector<1x1x1x256xf32>,
    return
  }
  func.func @transform_0(%arg0: i32, %arg1: i32) -> i32 {
    %c0_i32 = arith.constant 0 : i32
    %c0_i32_0 = arith.constant 0 : i32
    return %c0_i32 : i32
  }
  func.func @transform_1(%arg0: i32, %arg1: i32) -> i32 {
    %c0_i32 = arith.constant 0 : i32
    %c0_i32_0 = arith.constant 0 : i32
    return %c0_i32 : i32
  }
  func.func @transform_2(%arg0: i32, %arg1: i32) -> i32 {
    %c0_i32 = arith.constant 0 : i32
    %c0_i32_0 = arith.constant 0 : i32
    return %c0_i32 : i32
  }
  func.func @transform_3(%arg0: i32, %arg1: i32) -> i32 {
    %c0_i32 = arith.constant 0 : i32
    %c0_i32_0 = arith.constant 0 : i32
    return %c0_i32 : i32
  }
  func.func @transform_4(%arg0: i32, %arg1: i32) -> (i32, i32, i32, i32) {
    %c0_i32 = arith.constant 0 : i32
    %c0_i32_0 = arith.constant 0 : i32
    %c0_i32_1 = arith.constant 0 : i32
    return %arg0, %c0_i32, %arg1, %c0_i32_0 : i32, i32, i32, i32
  }
  func.func @transform_5(%arg0: i32, %arg1: i32) -> (i32, i32, i32, i32) {
    %c0_i32 = arith.constant 0 : i32
    %c0_i32_0 = arith.constant 0 : i32
    %c0_i32_1 = arith.constant 0 : i32
    return %arg0, %c0_i32, %arg1, %c0_i32_0 : i32, i32, i32, i32
  }
  func.func @transform_6(%arg0: i32, %arg1: i32) -> (i32, i32, i32, i32) {
    %c0_i32 = arith.constant 0 : i32
    %c0_i32_0 = arith.constant 0 : i32
    %c0_i32_1 = arith.constant 0 : i32
    return %arg0, %c0_i32, %arg1, %c0_i32_0 : i32, i32, i32, i32
  }
  func.func @transform_7(%arg0: i32, %arg1: i32) -> (i32, i32, i32, i32) {
    %c0_i32 = arith.constant 0 : i32
    %c0_i32_0 = arith.constant 0 : i32
    %c0_i32_1 = arith.constant 0 : i32
    return %arg0, %c0_i32, %arg1, %c0_i32_0 : i32, i32, i32, i32
  }
}

</mosaic_0001>

<llo_original>
// kernel: tpu_custom_call.1
$region0: #{tpu_custom_call.1}
  #allocation0 [shape = 'u32[]', space=smem, size = 0x4, offset = 0x4, fixed_abs, tag = 'smem constant byte address 0x4 - core index']
  #allocation1 [shape = 'u32[144,128]{1,0:T(1,128)}', space=vmem, size = 0x12000, scoped, tag = 'internal scratch']
  %s0 = inlined_call_operand.hbm [shape: f32[16], index: 0, kind: input, shape index: {}]
  %s1 = inlined_call_operand.vmem [shape: f32[4], index: 1, kind: input, shape index: {}]
  %s2 = inlined_call_operand.vmem [shape: f32[16], index: 2, kind: input, shape index: {}]
  %s3 = inlined_call_operand.hbm [shape: f32[4], index: 3, kind: input, shape index: {}]
  %s4 = inlined_call_operand.hbm [shape: f32[2,4,1,256], index: 4, kind: input, shape index: {}]
  %s5 = inlined_call_operand.vmem [shape: f32[2,4,1,256], index: 5, kind: input, shape index: {}]
  %s6 = inlined_call_operand.hbm [shape: f32[2,4,1,256], index: 6, kind: input, shape index: {}]
  %s7 = inlined_call_operand.hbm [shape: f32[2,4,1,256], index: 7, kind: output, shape index: {}]
  %s8 = sld [smem:[#allocation0]]
  $region85: #{tpu_custom_call.1} parent=0
    _
  %s10 = ssub.s32 1, %s8
  %s11 = scalar_select 0, %s10, %s8
  $region1: #{tpu_custom_call.1} parent=0
    #allocation2 [shape = 'u8[512]{0}', space=smem, size = 0x200, scoped, tag = 'input window, operand 0, single buffered']
    #allocation3 [shape = 's32[2]{0}', space=sflag, size = 0x8, scoped, tag = 'scoped memory for tpu_custom_call.1']
    #allocation4 [shape = 's32[2]{0}', space=sflag, size = 0x8, scoped, tag = 'scoped memory for tpu_custom_call.1']
    #allocation5 [shape = 's32[2]{0}', space=sflag, size = 0x8, scoped, tag = 'scoped memory for tpu_custom_call.1']
    #allocation6 [shape = 's32[2]{0}', space=sflag, size = 0x8, scoped, tag = 'scoped memory for tpu_custom_call.1']
    #allocation7 [shape = 'u8[512]{0}', space=smem, size = 0x200, scoped, tag = 'input window, operand 1, single buffered']
    #allocation8 [shape = 'u8[512]{0}', space=smem, size = 0x200, scoped, tag = 'input window, operand 2, single buffered']
    #allocation9 [shape = 's32[1]{0}', space=sflag, size = 0x4, scoped, tag = 'scoped memory for tpu_custom_call.1']
    #allocation10 [shape = 'u8[512]{0}', space=smem, size = 0x200, scoped, tag = 'input window, operand 3, single buffered']
    #allocation11 [shape = 's32[1]{0}', space=sflag, size = 0x4, scoped, tag = 'scoped memory for tpu_custom_call.1']
    #allocation12 [shape = 'u8[8192]{0}', space=vmem, size = 0x2000, scoped, tag = 'input window, operand 4']
    #allocation13 [shape = 'u8[8192]{0}', space=vmem, size = 0x2000, scoped, tag = 'input window, operand 6']
    #allocation14 [shape = 's32[2]{0}', space=sflag, size = 0x8, scoped, tag = 'scoped memory for tpu_custom_call.1']
    #allocation15 [shape = 'u8[8192]{0}', space=vmem, size = 0x2000, scoped, tag = 'output window, operand 0']
    %12 = vsyncpa [#allocation5], 0
    %13 = vsyncpa [#allocation6], 0
    %14 = vsyncpa [#allocation9], 0
    %15 = vsyncpa [#allocation11], 0
    %16 = vsyncpa [#allocation3], 0
    %s17 = scalar_lea.sflag [#allocation3], 1
    %18 = vsyncpa %s17, 0
    %19 = vsyncpa [#allocation14], 0
    %s20 = scalar_lea.sflag [#allocation14], 1
    %21 = vsyncpa %s20, 0
    %22 = vsyncpa [#allocation4], 0
    %s23 = scalar_lea.sflag [#allocation4], 1
    %24 = vsyncpa %s23, 0
    loop: start=0, step=1, limit=4
    $region2: #{tpu_custom_call.1} parent=1 // loop_pre_header
      _
    $region3: #{tpu_custom_call.1} parent=1 // loop_header
      %s26 = sphi 0, %s30
      %p27 = scmp.ge.s32.totalorder %s26, 4
      %s33 = sphi 0, %s45
      %s34 = sphi 0, %s41
      %s35 = sphi 0, %s33
      %s36 = sphi 0, %s34
      %s37 = sphi 0, %s35
      %s38 = sphi 0, %s36
      %s46 = sphi 0, %s46
      %s48 = sphi 0, %s46
      %s49 = sphi 0, %s48
      %s63 = sphi 0, %s49
      %s67 = sphi 0, %s67
      %s69 = sphi 0, %s67
      %s70 = sphi 0, %s69
      %s84 = sphi 0, %s70
      %s88 = sphi 0, %s88
      %s90 = sphi 0, %s88
      %s91 = sphi 0, %s90
      %s105 = sphi 0, %s91
      %s109 = sphi 0, %s109
      %s111 = sphi 0, %s109
      %s112 = sphi 0, %s111
      %s126 = sphi 0, %s112
      %s134 = sphi 0, %s136
      %s137 = sphi 0, %s134
      %s138 = sphi 0, %s137
      %s154 = sphi 0, %s138
      %s162 = sphi 0, %s164
      %s165 = sphi 0, %s162
      %s166 = sphi 0, %s165
      %s182 = sphi 0, %s166
      %s190 = sphi 0, %s192
      %s193 = sphi 0, %s190
      %s194 = sphi 0, %s193
      %s210 = sphi 0, %s194
      %s218 = sphi 0, %s220
      %s221 = sphi 0, %s218
      %s222 = sphi 0, %s221
      %s238 = sphi 0, %s222
    $region4: #{tpu_custom_call.1} parent=1 // loop_header_branch
      %29 = sbr.rel (%p27) target = $region8
    $region5: #{tpu_custom_call.1} parent=1 // loop_body
      %s31 = ssub.s32 %s26, 1
      %s32 = ssub.s32 %s26, 2
      %s39 = sadd.s32 1, %s34
      %p40 = scmp.ge.s32.totalorder %s39, 1
      %s41 = scalar_select %p40, 0, %s39
      %s42 = sadd.s32 1, %s33
      %s43 = scalar_select %p40, %s42, %s33
      %p44 = scmp.ge.s32.totalorder %s43, 2
      %s45 = scalar_select %p44, 0, %s43
      %s47 = sadd.s32 %s46, 1
      %p50 = scmp.eq.s32.totalorder %s26, 1
      %p51 = scmp.ne.s32.totalorder %s46, %s48
      %p52 = scmp.eq.s32.totalorder %s26, 0
      %p53 = por %p51, %p52
      %p54 = scmp.ne.s32.totalorder %s46, %s48
      %p55 = scmp.eq.s32.totalorder %s31, 1
      %p56 = por %p54, %p55
      %p57 = scmp.ne.s32.totalorder %s48, %s49
      %p58 = scmp.eq.s32.totalorder %s31, 0
      %p59 = por %p57, %p58
      %p60 = scmp.ne.s32.totalorder %s48, %s49
      %p61 = scmp.eq.s32.totalorder %s32, 1
      %p62 = por %p60, %p61
      %p64 = scmp.ne.s32.totalorder %s49, %s63
      %p65 = scmp.eq.s32.totalorder %s32, 0
      %p66 = por %p64, %p65
      %s68 = sadd.s32 %s67, 1
      %p71 = scmp.eq.s32.totalorder %s26, 1
      %p72 = scmp.ne.s32.totalorder %s67, %s69
      %p73 = scmp.eq.s32.totalorder %s26, 0
      %p74 = por %p72, %p73
      %p75 = scmp.ne.s32.totalorder %s67, %s69
      %p76 = scmp.eq.s32.totalorder %s31, 1
      %p77 = por %p75, %p76
      %p78 = scmp.ne.s32.totalorder %s69, %s70
      %p79 = scmp.eq.s32.totalorder %s31, 0
      %p80 = por %p78, %p79
      %p81 = scmp.ne.s32.totalorder %s69, %s70
      %p82 = scmp.eq.s32.totalorder %s32, 1
      %p83 = por %p81, %p82
      %p85 = scmp.ne.s32.totalorder %s70, %s84
      %p86 = scmp.eq.s32.totalorder %s32, 0
      %p87 = por %p85, %p86
      %s89 = sadd.s32 %s88, 1
      %p92 = scmp.eq.s32.totalorder %s26, 1
      %p93 = scmp.ne.s32.totalorder %s88, %s90
      %p94 = scmp.eq.s32.totalorder %s26, 0
      %p95 = por %p93, %p94
      %p96 = scmp.ne.s32.totalorder %s88, %s90
      %p97 = scmp.eq.s32.totalorder %s31, 1
      %p98 = por %p96, %p97
      %p99 = scmp.ne.s32.totalorder %s90, %s91
      %p100 = scmp.eq.s32.totalorder %s31, 0
      %p101 = por %p99, %p100
      %p102 = scmp.ne.s32.totalorder %s90, %s91
      %p103 = scmp.eq.s32.totalorder %s32, 1
      %p104 = por %p102, %p103
      %p106 = scmp.ne.s32.totalorder %s91, %s105
      %p107 = scmp.eq.s32.totalorder %s32, 0
      %p108 = por %p106, %p107
      %s110 = sadd.s32 %s109, 1
      %p113 = scmp.eq.s32.totalorder %s26, 1
      %p114 = scmp.ne.s32.totalorder %s109, %s111
      %p115 = scmp.eq.s32.totalorder %s26, 0
      %p116 = por %p114, %p115
      %p117 = scmp.ne.s32.totalorder %s109, %s111
      %p118 = scmp.eq.s32.totalorder %s31, 1
      %p119 = por %p117, %p118
      %p120 = scmp.ne.s32.totalorder %s111, %s112
      %p121 = scmp.eq.s32.totalorder %s31, 0
      %p122 = por %p120, %p121
      %p123 = scmp.ne.s32.totalorder %s111, %s112
      %p124 = scmp.eq.s32.totalorder %s32, 1
      %p125 = por %p123, %p124
      %p127 = scmp.ne.s32.totalorder %s112, %s126
      %p128 = scmp.eq.s32.totalorder %s32, 0
      %p129 = por %p127, %p128
      %s130 = ssub.s32 %s33, %s45
      %s131 = ssub.s32 %s34, %s41
      %s132 = sor.u32 %s130, %s131
      %p133 = scmp.eq.s32.totalorder %s132, 0
      %s135 = sadd.s32 %s134, 1
      %s136 = scalar_select %p133, %s134, %s135
      %p139 = pneg %p133
      %p140 = scmp.eq.s32.totalorder %s26, 1
      %p141 = por %p139, %p140
      %p142 = scmp.ne.s32.totalorder %s134, %s137
      %p143 = scmp.eq.s32.totalorder %s26, 0
      %p144 = por %p142, %p143
      %p145 = scmp.ne.s32.totalorder %s134, %s137
      %p146 = scmp.eq.s32.totalorder %s31, 1
      %p147 = por %p145, %p146
      %p148 = scmp.ne.s32.totalorder %s137, %s138
      %p149 = scmp.eq.s32.totalorder %s31, 0
      %p150 = por %p148, %p149
      %p151 = scmp.ne.s32.totalorder %s137, %s138
      %p152 = scmp.eq.s32.totalorder %s32, 1
      %p153 = por %p151, %p152
      %p155 = scmp.ne.s32.totalorder %s138, %s154
      %p156 = scmp.eq.s32.totalorder %s32, 0
      %p157 = por %p155, %p156
      %s158 = ssub.s32 %s33, %s45
      %s159 = ssub.s32 %s34, %s41
      %s160 = sor.u32 %s158, %s159
      %p161 = scmp.eq.s32.totalorder %s160, 0
      %s163 = sadd.s32 %s162, 1
      %s164 = scalar_select %p161, %s162, %s163
      %p167 = pneg %p161
      %p168 = scmp.eq.s32.totalorder %s26, 1
      %p169 = por %p167, %p168
      %p170 = scmp.ne.s32.totalorder %s162, %s165
      %p171 = scmp.eq.s32.totalorder %s26, 0
      %p172 = por %p170, %p171
      %p173 = scmp.ne.s32.totalorder %s162, %s165
      %p174 = scmp.eq.s32.totalorder %s31, 1
      %p175 = por %p173, %p174
      %p176 = scmp.ne.s32.totalorder %s165, %s166
      %p177 = scmp.eq.s32.totalorder %s31, 0
      %p178 = por %p176, %p177
      %p179 = scmp.ne.s32.totalorder %s165, %s166
      %p180 = scmp.eq.s32.totalorder %s32, 1
      %p181 = por %p179, %p180
      %p183 = scmp.ne.s32.totalorder %s166, %s182
      %p184 = scmp.eq.s32.totalorder %s32, 0
      %p185 = por %p183, %p184
      %s186 = ssub.s32 %s33, %s45
      %s187 = ssub.s32 %s34, %s41
      %s188 = sor.u32 %s186, %s187
      %p189 = scmp.eq.s32.totalorder %s188, 0
      %s191 = sadd.s32 %s190, 1
      %s192 = scalar_select %p189, %s190, %s191
      %p195 = pneg %p189
      %p196 = scmp.eq.s32.totalorder %s26, 1
      %p197 = por %p195, %p196
      %p198 = scmp.ne.s32.totalorder %s190, %s193
      %p199 = scmp.eq.s32.totalorder %s26, 0
      %p200 = por %p198, %p199
      %p201 = scmp.ne.s32.totalorder %s190, %s193
      %p202 = scmp.eq.s32.totalorder %s31, 1
      %p203 = por %p201, %p202
      %p204 = scmp.ne.s32.totalorder %s193, %s194
      %p205 = scmp.eq.s32.totalorder %s31, 0
      %p206 = por %p204, %p205
      %p207 = scmp.ne.s32.totalorder %s193, %s194
      %p208 = scmp.eq.s32.totalorder %s32, 1
      %p209 = por %p207, %p208
      %p211 = scmp.ne.s32.totalorder %s194, %s210
      %p212 = scmp.eq.s32.totalorder %s32, 0
      %p213 = por %p211, %p212
      %s214 = ssub.s32 %s33, %s45
      %s215 = ssub.s32 %s34, %s41
      %s216 = sor.u32 %s214, %s215
      %p217 = scmp.eq.s32.totalorder %s216, 0
      %s219 = sadd.s32 %s218, 1
      %s220 = scalar_select %p217, %s218, %s219
      %p223 = pneg %p217
      %p224 = scmp.eq.s32.totalorder %s26, 1
      %p225 = por %p223, %p224
      %p226 = scmp.ne.s32.totalorder %s218, %s221
      %p227 = scmp.eq.s32.totalorder %s26, 0
      %p228 = por %p226, %p227
      %p229 = scmp.ne.s32.totalorder %s218, %s221
      %p230 = scmp.eq.s32.totalorder %s31, 1
      %p231 = por %p229, %p230
      %p232 = scmp.ne.s32.totalorder %s221, %s222
      %p233 = scmp.eq.s32.totalorder %s31, 0
      %p234 = por %p232, %p233
      %p235 = scmp.ne.s32.totalorder %s221, %s222
      %p236 = scmp.eq.s32.totalorder %s32, 1
      %p237 = por %p235, %p236
      %p239 = scmp.ne.s32.totalorder %s222, %s238
      %p240 = scmp.eq.s32.totalorder %s32, 0
      %p241 = por %p239, %p240
      %p242 = scmp.le.s32.totalorder 1, %s26
      %p243 = scmp.lt.s32.totalorder %s26, 3
      %p244 = pnand %p242, %p243
      %p245 = pneg %p244
      // Predicated region
      $region9: #{tpu_custom_call.1} parent=5 // pred_check
        _
      $region10: #{tpu_custom_call.1} parent=5 // pred_check_branch
        %247 = sbr.rel (%p244) target = $region12
      $region11: #{tpu_custom_call.1} parent=5 // pred_region
        %s248 = ssub.s32 %s26, 1
        // Predicated region
        $region13: #{tpu_custom_call.1} parent=11 // pred_check
          %p249 = pneg %p59
        $region14: #{tpu_custom_call.1} parent=11 // pred_check_branch
          %251 = sbr.rel (%p249) target = $region16
        $region15: #{tpu_custom_call.1} parent=11 // pred_region
          %s253 = ssub.s32 16, 16
          %254 = vsyncadd [#allocation5], %s253
          %257 = dma.hbm_to_smem %s0, 16, [#allocation2], [#allocation5]
        $region16: #{tpu_custom_call.1} parent=11 // pred_fallthru
          _
        // Predicated region
        $region17: #{tpu_custom_call.1} parent=11 // pred_check
          %p258 = pneg %p80
        $region18: #{tpu_custom_call.1} parent=11 // pred_check_branch
          %260 = sbr.rel (%p258) target = $region20
        $region19: #{tpu_custom_call.1} parent=11 // pred_region
          %s262 = ssub.s32 16, 16
          %263 = vsyncadd [#allocation6], %s262
          %s265 = sshll.u32 %s1, 4
          %s266 = int_to_ptr.vmem [resolvable:$true] %s265
          %268 = dma.vmem_to_smem %s266, 16, [#allocation7], [#allocation6]
        $region20: #{tpu_custom_call.1} parent=11 // pred_fallthru
          _
        // Predicated region
        $region21: #{tpu_custom_call.1} parent=11 // pred_check
          %p269 = pneg %p101
        $region22: #{tpu_custom_call.1} parent=11 // pred_check_branch
          %271 = sbr.rel (%p269) target = $region24
        $region23: #{tpu_custom_call.1} parent=11 // pred_region
          %s273 = ssub.s32 16, 16
          %274 = vsyncadd [#allocation9], %s273
          %s276 = sshll.u32 %s2, 4
          %s277 = int_to_ptr.vmem [resolvable:$true] %s276
          %279 = dma.vmem_to_smem %s277, 16, [#allocation8], [#allocation9]
        $region24: #{tpu_custom_call.1} parent=11 // pred_fallthru
          _
        // Predicated region
        $region25: #{tpu_custom_call.1} parent=11 // pred_check
          %p280 = pneg %p122
        $region26: #{tpu_custom_call.1} parent=11 // pred_check_branch
          %282 = sbr.rel (%p280) target = $region28
        $region27: #{tpu_custom_call.1} parent=11 // pred_region
          %s284 = ssub.s32 16, 16
          %285 = vsyncadd [#allocation11], %s284
          %288 = dma.hbm_to_smem %s3, 16, [#allocation10], [#allocation11]
        $region28: #{tpu_custom_call.1} parent=11 // pred_fallthru
          _
      $region12: #{tpu_custom_call.1} parent=5 // pred_fallthru
        _
      %p289 = scmp.lt.s32.totalorder %s26, 2
      // Predicated region
      $region29: #{tpu_custom_call.1} parent=5 // pred_check
        %p290 = pneg %p289
      $region30: #{tpu_custom_call.1} parent=5 // pred_check_branch
        %292 = sbr.rel (%p290) target = $region32
      $region31: #{tpu_custom_call.1} parent=5 // pred_region
        // Predicated region
        $region33: #{tpu_custom_call.1} parent=31 // pred_check
          %p293 = pneg %p144
        $region34: #{tpu_custom_call.1} parent=31 // pred_check_branch
          %295 = sbr.rel (%p293) target = $region36
        $region35: #{tpu_custom_call.1} parent=31 // pred_region
          %s296 = sand.u32 %s134, 1
          %s297 = scalar_lea.sflag [#allocation3], %s296
          %s298 = sand.u32 %s134, 1
          %s299 = smul.addr %s298, 8
          %s300 = scalar_lea.vmem [#allocation12], %s299
          %s302 = ssub.s32 128, 128
          %303 = vsyncadd %s297, %s302
          %s304 = smul.addr %s34, 2
          %s305 = smul.addr %s33, 8
          %s306 = sadd.s32 %s304, %s305
          %s307 = smul.addr %s306, 16
          %s308 = scalar_lea.hbm %s4, %s307
          %s309 = sshll.u32 %s300, 4
          %s310 = int_to_ptr.vmem [resolvable:$true] %s309
          %315 = dma.hbm_to_vmem [thread:$0]  %s308, 128, %s310, %s297, 32, 32, 2
        $region36: #{tpu_custom_call.1} parent=31 // pred_fallthru
          _
        // Predicated region
        $region37: #{tpu_custom_call.1} parent=31 // pred_check
          %p316 = pneg %p172
        $region38: #{tpu_custom_call.1} parent=31 // pred_check_branch
          %318 = sbr.rel (%p316) target = $region40
        $region39: #{tpu_custom_call.1} parent=31 // pred_region
          %p319 = scmp.lt.s32.totalorder %s33, 1
          %s320 = scalar_select %p319, %s33, 1
          %p321 = scmp.lt.s32.totalorder %s34, 0
          %s322 = scalar_select %p321, %s34, 0
          %s323 = smul.addr %s322, 2
          %s324 = smul.addr %s320, 8
          %s325 = sadd.s32 %s323, %s324
          %s326 = scalar_lea.vmem %s5, %s325
        $region40: #{tpu_custom_call.1} parent=31 // pred_fallthru
          _
        // Predicated region
        $region41: #{tpu_custom_call.1} parent=31 // pred_check
          %p327 = pneg %p200
        $region42: #{tpu_custom_call.1} parent=31 // pred_check_branch
          %329 = sbr.rel (%p327) target = $region44
        $region43: #{tpu_custom_call.1} parent=31 // pred_region
          %s330 = sand.u32 %s190, 1
          %s331 = scalar_lea.sflag [#allocation14], %s330
          %s332 = sand.u32 %s190, 1
          %s333 = smul.addr %s332, 8
          %s334 = scalar_lea.vmem [#allocation13], %s333
          %s336 = ssub.s32 128, 128
          %337 = vsyncadd %s331, %s336
          %s338 = smul.addr %s34, 2
          %s339 = smul.addr %s33, 8
          %s340 = sadd.s32 %s338, %s339
          %s341 = smul.addr %s340, 16
          %s342 = scalar_lea.hbm %s6, %s341
          %s343 = sshll.u32 %s334, 4
          %s344 = int_to_ptr.vmem [resolvable:$true] %s343
          %349 = dma.hbm_to_vmem [thread:$0]  %s342, 128, %s344, %s331, 32, 32, 2
        $region44: #{tpu_custom_call.1} parent=31 // pred_fallthru
          _
      $region32: #{tpu_custom_call.1} parent=5 // pred_fallthru
        _
      %p350 = scmp.le.s32.totalorder 1, %s26
      %p351 = scmp.lt.s32.totalorder %s26, 3
      %p352 = pnand %p350, %p351
      %p353 = pneg %p352
      // Predicated region
      $region45: #{tpu_custom_call.1} parent=5 // pred_check
        _
      $region46: #{tpu_custom_call.1} parent=5 // pred_check_branch
        %355 = sbr.rel (%p352) target = $region48
      $region47: #{tpu_custom_call.1} parent=5 // pred_region
        %s356 = ssub.s32 %s26, 1
        // Predicated region
        $region49: #{tpu_custom_call.1} parent=47 // pred_check
          %p357 = pneg %p59
        $region50: #{tpu_custom_call.1} parent=47 // pred_check_branch
          %359 = sbr.rel (%p357) target = $region52
        $region51: #{tpu_custom_call.1} parent=47 // pred_region
          %360 = dma.done [#allocation5], 16
        $region52: #{tpu_custom_call.1} parent=47 // pred_fallthru
          _
        // Predicated region
        $region53: #{tpu_custom_call.1} parent=47 // pred_check
          %p361 = pneg %p80
        $region54: #{tpu_custom_call.1} parent=47 // pred_check_branch
          %363 = sbr.rel (%p361) target = $region56
        $region55: #{tpu_custom_call.1} parent=47 // pred_region
          %364 = dma.done [#allocation6], 16
        $region56: #{tpu_custom_call.1} parent=47 // pred_fallthru
          _
        // Predicated region
        $region57: #{tpu_custom_call.1} parent=47 // pred_check
          %p365 = pneg %p101
        $region58: #{tpu_custom_call.1} parent=47 // pred_check_branch
          %367 = sbr.rel (%p365) target = $region60
        $region59: #{tpu_custom_call.1} parent=47 // pred_region
          %368 = dma.done [#allocation9], 16
        $region60: #{tpu_custom_call.1} parent=47 // pred_fallthru
          _
        // Predicated region
        $region61: #{tpu_custom_call.1} parent=47 // pred_check
          %p369 = pneg %p122
        $region62: #{tpu_custom_call.1} parent=47 // pred_check_branch
          %371 = sbr.rel (%p369) target = $region64
        $region63: #{tpu_custom_call.1} parent=47 // pred_region
          %372 = dma.done [#allocation11], 16
        $region64: #{tpu_custom_call.1} parent=47 // pred_fallthru
          _
        %s373 = sand.u32 %s137, 1
        %s374 = scalar_lea.sflag [#allocation3], %s373
        %s375 = sand.u32 %s137, 1
        %s376 = smul.addr %s375, 8
        %s377 = scalar_lea.vmem [#allocation12], %s376
        // Predicated region
        $region65: #{tpu_custom_call.1} parent=47 // pred_check
          %p378 = pneg %p150
        $region66: #{tpu_custom_call.1} parent=47 // pred_check_branch
          %380 = sbr.rel (%p378) target = $region68
        $region67: #{tpu_custom_call.1} parent=47 // pred_region
          %381 = dma.done %s374, 128
        $region68: #{tpu_custom_call.1} parent=47 // pred_fallthru
          _
        %s382 = sand.u32 %s193, 1
        %s383 = scalar_lea.sflag [#allocation14], %s382
        %s384 = sand.u32 %s193, 1
        %s385 = smul.addr %s384, 8
        %s386 = scalar_lea.vmem [#allocation13], %s385
        // Predicated region
        $region69: #{tpu_custom_call.1} parent=47 // pred_check
          %p387 = pneg %p206
        $region70: #{tpu_custom_call.1} parent=47 // pred_check_branch
          %389 = sbr.rel (%p387) target = $region72
        $region71: #{tpu_custom_call.1} parent=47 // pred_region
          %390 = dma.done %s383, 128
        $region72: #{tpu_custom_call.1} parent=47 // pred_fallthru
          _
        %391 = sfence
        %p392 = pneg %p59
        %p393 = pneg %p56
        %p394 = pneg %p80
        %p395 = pneg %p77
        %p396 = pneg %p101
        %p397 = pneg %p98
        %p398 = pneg %p122
        %p399 = pneg %p119
        %s400 = sand.u32 %s137, 1
        %s401 = scalar_lea.sflag [#allocation3], %s400
        %s402 = sand.u32 %s137, 1
        %s403 = smul.addr %s402, 8
        %s404 = scalar_lea.vmem [#allocation12], %s403
        %p405 = pneg %p150
        %p406 = pneg %p147
        %p407 = scmp.lt.s32.totalorder %s35, 1
        %s408 = scalar_select %p407, %s35, 1
        %p409 = scmp.lt.s32.totalorder %s36, 0
        %s410 = scalar_select %p409, %s36, 0
        %s411 = smul.addr %s410, 2
        %s412 = smul.addr %s408, 8
        %s413 = sadd.s32 %s411, %s412
        %s414 = scalar_lea.vmem %s5, %s413
        %p415 = pneg %p178
        %p416 = pneg %p175
        %s417 = sand.u32 %s193, 1
        %s418 = scalar_lea.sflag [#allocation14], %s417
        %s419 = sand.u32 %s193, 1
        %s420 = smul.addr %s419, 8
        %s421 = scalar_lea.vmem [#allocation13], %s420
        %p422 = pneg %p206
        %p423 = pneg %p203
        %p424 = pneg %p234
        %p425 = pneg %p231
        %s426 = sand.u32 %s221, 1
        %s427 = scalar_lea.sflag [#allocation4], %s426
        %s428 = sand.u32 %s221, 1
        %s429 = smul.addr %s428, 8
        %s430 = scalar_lea.vmem [#allocation15], %s429
        %p431 = scmp.lt.s32.totalorder %s35, 1
        %s432 = scalar_select %p431, %s35, 1
        %p433 = scmp.lt.s32.totalorder %s36, 0
        %s434 = scalar_select %p433, %s36, 0
        %s435 = smul.addr %s434, 2
        %s436 = smul.addr %s432, 8
        %s437 = sadd.s32 %s435, %s436
        %s438 = scalar_lea.vmem %s5, %s437
        %v439 = vld [vmem:[%s438] sm:$0x3]
        %s440 = scalar_lea.vmem %s438, 2
        %v441 = vld [vmem:[%s440] sm:$0x3]
        %s442 = scalar_lea.vmem %s438, 4
        %v443 = vld [vmem:[%s442] sm:$0x3]
        %s444 = scalar_lea.vmem %s438, 6
        %v445 = vld [vmem:[%s444] sm:$0x3]
        %s446 = sld [smem:[#allocation2]]
        %v447 = vstv %s446
        %v448 = vmul.f32 %v447, %v439
        %s449 = sld [smem:[#allocation2 + $0x1]]
        %v450 = vstv %s449
        %v451 = vmul.f32 %v450, %v441
        %v452 = vadd.f32 %v448, %v451
        %s453 = sld [smem:[#allocation2 + $0x2]]
        %v454 = vstv %s453
        %v455 = vmul.f32 %v454, %v443
        %v456 = vadd.f32 %v452, %v455
        %s457 = sld [smem:[#allocation2 + $0x3]]
        %v458 = vstv %s457
        %v459 = vmul.f32 %v458, %v445
        %v460 = vadd.f32 %v456, %v459
        %s461 = sld [smem:[#allocation7]]
        %v462 = vstv %s461
        %v463 = vadd.f32 %v460, %v462
        %v464 = vmax.f32 %v463, 0.0
        %s465 = sld [smem:[#allocation2 + $0x4]]
        %v466 = vstv %s465
        %v467 = vmul.f32 %v466, %v439
        %s468 = sld [smem:[#allocation2 + $0x5]]
        %v469 = vstv %s468
        %v470 = vmul.f32 %v469, %v441
        %v471 = vadd.f32 %v467, %v470
        %s472 = sld [smem:[#allocation2 + $0x6]]
        %v473 = vstv %s472
        %v474 = vmul.f32 %v473, %v443
        %v475 = vadd.f32 %v471, %v474
        %s476 = sld [smem:[#allocation2 + $0x7]]
        %v477 = vstv %s476
        %v478 = vmul.f32 %v477, %v445
        %v479 = vadd.f32 %v475, %v478
        %s480 = sld [smem:[#allocation7 + $0x1]]
        %v481 = vstv %s480
        %v482 = vadd.f32 %v479, %v481
        %v483 = vmax.f32 %v482, 0.0
        %s484 = sld [smem:[#allocation2 + $0x8]]
        %v485 = vstv %s484
        %v486 = vmul.f32 %v485, %v439
        %s487 = sld [smem:[#allocation2 + $0x9]]
        %v488 = vstv %s487
        %v489 = vmul.f32 %v488, %v441
        %v490 = vadd.f32 %v486, %v489
        %s491 = sld [smem:[#allocation2 + $0xa]]
        %v492 = vstv %s491
        %v493 = vmul.f32 %v492, %v443
        %v494 = vadd.f32 %v490, %v493
        %s495 = sld [smem:[#allocation2 + $0xb]]
        %v496 = vstv %s495
        %v497 = vmul.f32 %v496, %v445
        %v498 = vadd.f32 %v494, %v497
        %s499 = sld [smem:[#allocation7 + $0x2]]
        %v500 = vstv %s499
        %v501 = vadd.f32 %v498, %v500
        %v502 = vmax.f32 %v501, 0.0
        %s503 = sld [smem:[#allocation2 + $0xc]]
        %v504 = vstv %s503
        %v505 = vmul.f32 %v504, %v439
        %s506 = sld [smem:[#allocation2 + $0xd]]
        %v507 = vstv %s506
        %v508 = vmul.f32 %v507, %v441
        %v509 = vadd.f32 %v505, %v508
        %s510 = sld [smem:[#allocation2 + $0xe]]
        %v511 = vstv %s510
        %v512 = vmul.f32 %v511, %v443
        %v513 = vadd.f32 %v509, %v512
        %s514 = sld [smem:[#allocation2 + $0xf]]
        %v515 = vstv %s514
        %v516 = vmul.f32 %v515, %v445
        %v517 = vadd.f32 %v513, %v516
        %s518 = sld [smem:[#allocation7 + $0x3]]
        %v519 = vstv %s518
        %v520 = vadd.f32 %v517, %v519
        %v521 = vmax.f32 %v520, 0.0
        %s522 = sld [smem:[#allocation8]]
        %v523 = vstv %s522
        %v524 = vmul.f32 %v523, %v464
        %s525 = sld [smem:[#allocation8 + $0x1]]
        %v526 = vstv %s525
        %v527 = vmul.f32 %v526, %v483
        %v528 = vadd.f32 %v524, %v527
        %s529 = sld [smem:[#allocation8 + $0x2]]
        %v530 = vstv %s529
        %v531 = vmul.f32 %v530, %v502
        %v532 = vadd.f32 %v528, %v531
        %s533 = sld [smem:[#allocation8 + $0x3]]
        %v534 = vstv %s533
        %v535 = vmul.f32 %v534, %v521
        %v536 = vadd.f32 %v532, %v535
        %s537 = sld [smem:[#allocation10]]
        %v538 = vstv %s537
        %v539 = vadd.f32 %v536, %v538
        %v540 = vxor.u32 %v539, 2147483648
        %v541 = vmul.f32 %v540, 1.442695
        %v542 = vpow.pop %v541
        %v543 = vadd.f32 %v542, 1.0
        %v544 = vrcp.pop %v543
        %v545 = vmul.f32 1.0, %v544
        %v546 = vld [vmem:[%s377] sm:$0x3]
        %v547 = vld [vmem:[%s386] sm:$0x3]
        %v548 = vsub.f32 %v546, %v547
        %v549 = vmul.f32 %v545, %v548
        %v550 = vadd.f32 %v547, %v549
        %v551 = vlaneseq
        %vm552 = vcmp.ge.s32.totalorder %v551, 0
        %vm553 = vcmp.lt.s32.totalorder %v551, 256
        %vm554 = vmand %vm552, %vm553
        %555 = vst.msk [vmem:[%s430] sm:$0x3] %vm554, %v550
        %s556 = sld [smem:[#allocation8 + $0x4]]
        %v557 = vstv %s556
        %v558 = vmul.f32 %v557, %v464
        %s559 = sld [smem:[#allocation8 + $0x5]]
        %v560 = vstv %s559
        %v561 = vmul.f32 %v560, %v483
        %v562 = vadd.f32 %v558, %v561
        %s563 = sld [smem:[#allocation8 + $0x6]]
        %v564 = vstv %s563
        %v565 = vmul.f32 %v564, %v502
        %v566 = vadd.f32 %v562, %v565
        %s567 = sld [smem:[#allocation8 + $0x7]]
        %v568 = vstv %s567
        %v569 = vmul.f32 %v568, %v521
        %v570 = vadd.f32 %v566, %v569
        %s571 = sld [smem:[#allocation10 + $0x1]]
        %v572 = vstv %s571
        %v573 = vadd.f32 %v570, %v572
        %v574 = vxor.u32 %v573, 2147483648
        %v575 = vmul.f32 %v574, 1.442695
        %v576 = vpow.pop %v575
        %v577 = vadd.f32 %v576, 1.0
        %v578 = vrcp.pop %v577
        %v579 = vmul.f32 1.0, %v578
        %s580 = scalar_lea.vmem %s377, 2 [#allocation12]
        %v581 = vld [vmem:[%s580] sm:$0x3]
        %s582 = scalar_lea.vmem %s386, 2 [#allocation13]
        %v583 = vld [vmem:[%s582] sm:$0x3]
        %v584 = vsub.f32 %v581, %v583
        %v585 = vmul.f32 %v579, %v584
        %v586 = vadd.f32 %v583, %v585
        %s587 = scalar_lea.vmem %s430, 2 [#allocation15]
        %588 = vst.msk [vmem:[%s587] sm:$0x3] %vm554, %v586
        %s589 = sld [smem:[#allocation8 + $0x8]]
        %v590 = vstv %s589
        %v591 = vmul.f32 %v590, %v464
        %s592 = sld [smem:[#allocation8 + $0x9]]
        %v593 = vstv %s592
        %v594 = vmul.f32 %v593, %v483
        %v595 = vadd.f32 %v591, %v594
        %s596 = sld [smem:[#allocation8 + $0xa]]
        %v597 = vstv %s596
        %v598 = vmul.f32 %v597, %v502
        %v599 = vadd.f32 %v595, %v598
        %s600 = sld [smem:[#allocation8 + $0xb]]
        %v601 = vstv %s600
        %v602 = vmul.f32 %v601, %v521
        %v603 = vadd.f32 %v599, %v602
        %s604 = sld [smem:[#allocation10 + $0x2]]
        %v605 = vstv %s604
        %v606 = vadd.f32 %v603, %v605
        %v607 = vxor.u32 %v606, 2147483648
        %v608 = vmul.f32 %v607, 1.442695
        %v609 = vpow.pop %v608
        %v610 = vadd.f32 %v609, 1.0
        %v611 = vrcp.pop %v610
        %v612 = vmul.f32 1.0, %v611
        %s613 = scalar_lea.vmem %s377, 4 [#allocation12]
        %v614 = vld [vmem:[%s613] sm:$0x3]
        %s615 = scalar_lea.vmem %s386, 4 [#allocation13]
        %v616 = vld [vmem:[%s615] sm:$0x3]
        %v617 = vsub.f32 %v614, %v616
        %v618 = vmul.f32 %v612, %v617
        %v619 = vadd.f32 %v616, %v618
        %s620 = scalar_lea.vmem %s430, 4 [#allocation15]
        %621 = vst.msk [vmem:[%s620] sm:$0x3] %vm554, %v619
        %s622 = sld [smem:[#allocation8 + $0xc]]
        %v623 = vstv %s622
        %v624 = vmul.f32 %v623, %v464
        %s625 = sld [smem:[#allocation8 + $0xd]]
        %v626 = vstv %s625
        %v627 = vmul.f32 %v626, %v483
        %v628 = vadd.f32 %v624, %v627
        %s629 = sld [smem:[#allocation8 + $0xe]]
        %v630 = vstv %s629
        %v631 = vmul.f32 %v630, %v502
        %v632 = vadd.f32 %v628, %v631
        %s633 = sld [smem:[#allocation8 + $0xf]]
        %v634 = vstv %s633
        %v635 = vmul.f32 %v634, %v521
        %v636 = vadd.f32 %v632, %v635
        %s637 = sld [smem:[#allocation10 + $0x3]]
        %v638 = vstv %s637
        %v639 = vadd.f32 %v636, %v638
        %v640 = vxor.u32 %v639, 2147483648
        %v641 = vmul.f32 %v640, 1.442695
        %v642 = vpow.pop %v641
        %v643 = vadd.f32 %v642, 1.0
        %v644 = vrcp.pop %v643
        %v645 = vmul.f32 1.0, %v644
        %s646 = scalar_lea.vmem %s377, 6 [#allocation12]
        %v647 = vld [vmem:[%s646] sm:$0x3]
        %s648 = scalar_lea.vmem %s386, 6 [#allocation13]
        %v649 = vld [vmem:[%s648] sm:$0x3]
        %v650 = vsub.f32 %v647, %v649
        %v651 = vmul.f32 %v645, %v650
        %v652 = vadd.f32 %v649, %v651
        %s653 = scalar_lea.vmem %s430, 6 [#allocation15]
        %654 = vst.msk [vmem:[%s653] sm:$0x3] %vm554, %v652
        %s655 = sand.u32 %s221, 1
        %s656 = scalar_lea.sflag [#allocation4], %s655
        %s657 = sand.u32 %s221, 1
        %s658 = smul.addr %s657, 8
        %s659 = scalar_lea.vmem [#allocation15], %s658
        // Predicated region
        $region73: #{tpu_custom_call.1} parent=47 // pred_check
          %p660 = pneg %p231
        $region74: #{tpu_custom_call.1} parent=47 // pred_check_branch
          %662 = sbr.rel (%p660) target = $region76
        $region75: #{tpu_custom_call.1} parent=47 // pred_region
          %s664 = ssub.s32 128, 128
          %665 = vsyncadd %s656, %s664
          %s666 = smul.addr %s36, 2
          %s667 = smul.addr %s35, 8
          %s668 = sadd.s32 %s666, %s667
          %s669 = smul.addr %s668, 16
          %s670 = scalar_lea.hbm %s7, %s669
          %s671 = sshll.u32 %s659, 4
          %s672 = int_to_ptr.vmem [resolvable:$true] %s671
          %677 = dma.vmem_to_hbm [thread:$0]  %s672, 128, %s670, %s656, 32, 32, 2
        $region76: #{tpu_custom_call.1} parent=47 // pred_fallthru
          _
      $region48: #{tpu_custom_call.1} parent=5 // pred_fallthru
        _
      %p678 = scmp.le.s32.totalorder 2, %s26
      // Predicated region
      $region77: #{tpu_custom_call.1} parent=5 // pred_check
        %p679 = pneg %p678
      $region78: #{tpu_custom_call.1} parent=5 // pred_check_branch
        %681 = sbr.rel (%p679) target = $region80
      $region79: #{tpu_custom_call.1} parent=5 // pred_region
        %s682 = ssub.s32 %s26, 2
        // Predicated region
        $region81: #{tpu_custom_call.1} parent=79 // pred_check
          %p683 = pneg %p237
        $region82: #{tpu_custom_call.1} parent=79 // pred_check_branch
          %685 = sbr.rel (%p683) target = $region84
        $region83: #{tpu_custom_call.1} parent=79 // pred_region
          %s686 = sand.u32 %s222, 1
          %s687 = scalar_lea.sflag [#allocation4], %s686
          %s688 = sand.u32 %s222, 1
          %s689 = smul.addr %s688, 8
          %s690 = scalar_lea.vmem [#allocation15], %s689
          %691 = dma.done %s687, 128
        $region84: #{tpu_custom_call.1} parent=79 // pred_fallthru
          _
      $region80: #{tpu_custom_call.1} parent=5 // pred_fallthru
        _
    $region6: #{tpu_custom_call.1} parent=1 // loop_footer
      %s30 = sadd.s32 1, %s26
    $region7: #{tpu_custom_call.1} parent=1 // loop_footer_branch
      %25 = sbr.rel target = $region3
    $region8: #{tpu_custom_call.1} parent=1 // loop_exit
      _
    %692 = vsyncpa [#allocation3], 1
    %s693 = scalar_lea.sflag [#allocation3], 1
    %694 = vsyncpa %s693, 1
    %695 = vsyncpa [#allocation14], 1
    %s696 = scalar_lea.sflag [#allocation14], 1
    %697 = vsyncpa %s696, 1
    %698 = vsyncpa [#allocation4], 1
    %s699 = scalar_lea.sflag [#allocation4], 1
    %700 = vsyncpa %s699, 1
    %701 = vsyncpa [#allocation5], 1
    %s702 = scalar_lea.sflag [#allocation5], 1
    %703 = vsyncpa %s702, 1
    %704 = vsyncpa [#allocation11], 1
    %705 = vsyncpa [#allocation6], 1
    %s706 = scalar_lea.sflag [#allocation6], 1
    %707 = vsyncpa %s706, 1
    %708 = vsyncpa [#allocation9], 1

</llo_original>
